<compile_context>
chip_gen: v6e
topology: v6e:2x2x1
jax: 0.10.0
libtpu: 0.0.40
codegen_flags: <defaults>
</compile_context>

<pallas_src>
import functools

import jax
import jax.numpy as jnp
from jax.experimental import pallas as pl
from jax.experimental.pallas import tpu as pltpu


def _round_up(x, m):
    return ((x + m - 1) // m) * m


def _choose_tile_b(B):
    """~512 rows per grid step, >=2 steps when possible (v7x: 2 TCs), tile_b % 8 == 0."""
    if B <= 8:
        return B                      # single step; block dim == full array dim is allowed
    n_steps = max(2, -(-B // 512))
    tile_b = -(-B // n_steps)
    return min(_round_up(tile_b, 8), _round_up(B, 8))


def edgenet_kernel(parent_ref, childs_ref, w1_ref, b1_ref, w2_ref, b2_ref, out_ref):
    d = parent_ref.shape[-1]                      # D (static)
    n = childs_ref.shape[-1] // d                 # N (static)
    # 'mul' edge combine: replicate the parent across the N children folded into lanes.
    p_rep = jnp.concatenate([parent_ref[...]] * n, axis=-1)      # (tile_b, N*D)
    x = p_rep * childs_ref[...]                                  # (tile_b, N*D)
    # layer 1: per-child Linear(D -> H) via block-diagonal weight, + ReLU (f32 MXU acc)
    h1 = jnp.maximum(
        jnp.dot(x, w1_ref[...], preferred_element_type=jnp.float32) + b1_ref[...], 0.0)
    # layer 2: per-child Linear(H -> H) + ReLU
    h2 = jnp.maximum(
        jnp.dot(h1, w2_ref[...], preferred_element_type=jnp.float32) + b2_ref[...], 0.0)
    out_ref[...] = h2.astype(out_ref.dtype)                      # (tile_b, N*H), 256-wide vst


@functools.partial(jax.jit, static_argnames=("tile_b",))
def edgenet_forward_batched(parent_vecs, child_vecs, w1, b1, w2, b2, tile_b=None):
    """Batched EdgeNet forward.

    parent_vecs: (B, D), child_vecs: (B, N, D)  ->  (B, N, H) edge embeddings.
    """
    B, N, D = child_vecs.shape
    H = w1.shape[1]
    ND, NH = N * D, N * H
    if tile_b is None:
        tile_b = _choose_tile_b(B)
    Bp = _round_up(B, tile_b)

    # Fold N into the minor dim (contiguous -> free reshape). No D/H padding in HBM.
    childs2d = child_vecs.reshape(B, ND)
    parent2d = parent_vecs
    if Bp != B:
        parent2d = jnp.pad(parent2d, ((0, Bp - B), (0, 0)))
        childs2d = jnp.pad(childs2d, ((0, Bp - B), (0, 0)))

    # Tiny block-diagonal weights (grid-invariant, stay resident in VMEM).
    eye_n = jnp.eye(N, dtype=w1.dtype)
    w1_bd = jnp.kron(eye_n, w1)                   # (N*D, N*H)
    b1_bd = jnp.tile(b1, N)[None, :]              # (1, N*H)
    w2_bd = jnp.kron(eye_n, w2)                   # (N*H, N*H)
    b2_bd = jnp.tile(b2, N)[None, :]              # (1, N*H)

    out_dtype = child_vecs.dtype
    grid = (Bp // tile_b,)

    itemsize = jnp.dtype(out_dtype).itemsize
    cost = pl.CostEstimate(
        flops=4 * B * N * D * H,                  # two (D->H)/(H->H) matmuls per edge
        transcendentals=0,
        bytes_accessed=itemsize * (Bp * D + Bp * ND + Bp * NH)
        + 4 * (ND * NH + NH * NH + 2 * NH),
    )

    out = pl.pallas_call(
        edgenet_kernel,
        out_shape=jax.ShapeDtypeStruct((Bp, NH), out_dtype),
        grid_spec=pl.GridSpec(
            grid=grid,
            in_specs=[
                pl.BlockSpec((tile_b, D), lambda i: (i, 0)),    # parents (per tile)
                pl.BlockSpec((tile_b, ND), lambda i: (i, 0)),   # children, N folded into lanes
                pl.BlockSpec((ND, NH), lambda i: (0, 0)),       # W1 block-diag (grid-invariant)
                pl.BlockSpec((1, NH), lambda i: (0, 0)),        # b1 tiled
                pl.BlockSpec((NH, NH), lambda i: (0, 0)),       # W2 block-diag
                pl.BlockSpec((1, NH), lambda i: (0, 0)),        # b2 tiled
            ],
            out_specs=pl.BlockSpec((tile_b, NH), lambda i: (i, 0)),
        ),
        compiler_params=pltpu.CompilerParams(
            dimension_semantics=("parallel",)),   # batch axis -> shard across TCs (v7x)
        cost_estimate=cost,
    )(parent2d, childs2d, w1_bd, b1_bd, w2_bd, b2_bd)

    if Bp != B:
        out = out[:B]
    return out.reshape(B, N, H)


def edgenet_forward(parent_vec, child_vecs, w1, b1, w2, b2):
    """Single edge-set forward matching EdgeNet.forward(parent_vec, child_vecs).

    Per the perf review, an (N=8, D=32) problem is pure launch overhead for a
    Pallas call, so this path is plain jnp; batch edge-sets to use the kernel.
    Returns the stacked (N, H) array (index rows == torch.unbind).
    """
    x = parent_vec[None, :] * child_vecs
    h = jnp.maximum(x @ w1 + b1, 0.0)
    h = jnp.maximum(h @ w2 + b2, 0.0)
    return h


def init_linear_params(key, in_features, out_features):
    """Deterministic init mimicking nn.Linear (uniform +/- 1/sqrt(in))."""
    kw, kb = jax.random.split(key)
    bound = 1.0 / jnp.sqrt(jnp.float32(in_features))
    # stored as (in, out) so the kernel does x @ W
    w = jax.random.uniform(kw, (in_features, out_features), jnp.float32,
                           minval=-bound, maxval=bound)
    b = jax.random.uniform(kb, (out_features,), jnp.float32,
                           minval=-bound, maxval=bound)
    return w, b


if __name__ == "__main__":
    # EdgeNet(parent_size=32, child_size=32, output_size=32,
    #         edge_feature_combine_method='mul', num_layers=2)
    parent_size = 32
    child_size = 32
    output_size = 32
    num_children = 8
    batch = 16          # batch of edge-sets processed in one pallas_call (grid of 2 steps)

    key = jax.random.PRNGKey(0)
    k_parent, k_childs, k_l1, k_l2 = jax.random.split(key, 4)

    parent_vecs = jax.random.normal(k_parent, (batch, parent_size), jnp.float32)
    child_vecs = jax.random.normal(k_childs, (batch, num_children, child_size), jnp.float32)

    w1, b1 = init_linear_params(k_l1, parent_size, output_size)   # input_layer
    w2, b2 = init_linear_params(k_l2, output_size, output_size)   # hidden layer

    # batched path (the high-throughput entry point)
    edge_embeddings = edgenet_forward_batched(parent_vecs, child_vecs, w1, b1, w2, b2)
    jax.block_until_ready(edge_embeddings)

    # reference check in plain JAX
    x_ref = parent_vecs[:, None, :] * child_vecs
    h_ref = jnp.maximum(x_ref @ w1 + b1, 0.0)
    h_ref = jnp.maximum(h_ref @ w2 + b2, 0.0)
    assert edge_embeddings.shape == (batch, num_children, output_size)
    assert jnp.allclose(edge_embeddings, h_ref, atol=1e-5, rtol=1e-5)

    # single edge-set path (matches the original module's forward signature)
    single = edgenet_forward(parent_vecs[0], child_vecs[0], w1, b1, w2, b2)
    jax.block_until_ready(single)
    assert single.shape == (num_children, output_size)
    assert jnp.allclose(single, h_ref[0], atol=1e-5, rtol=1e-5)

    print("KERNEL_OK")
</pallas_src>

<mosaic_0001>
module attributes {stable_mosaic.version = 11 : i64} {
  func.func @edgenet_kernel(%arg0: i32, %arg1: memref<8x32xf32, #tpu.memory_space<vmem>>, %arg2: memref<8x256xf32, #tpu.memory_space<vmem>>, %arg3: memref<256x256xf32, #tpu.memory_space<vmem>>, %arg4: memref<1x256xf32, #tpu.memory_space<vmem>>, %arg5: memref<256x256xf32, #tpu.memory_space<vmem>>, %arg6: memref<1x256xf32, #tpu.memory_space<vmem>>, %arg7: memref<8x256xf32, #tpu.memory_space<vmem>>) attributes {dimension_semantics = [#tpu.dimension_semantics<parallel>], iteration_bounds = array<i64: 2>, scalar_prefetch = 0 : i64, scratch_operands = 0 : i64, tpu.core_type = #tpu.core_type<tc>, window_params = [{transform_indices = @transform_0, window_bounds = array<i64: 8, 32>}, {transform_indices = @transform_1, window_bounds = array<i64: 8, 256>}, {pipeline_mode = #tpu.pipeline_mode<synchronous>, transform_indices = @transform_2, window_bounds = array<i64: 256, 256>}, {pipeline_mode = #tpu.pipeline_mode<synchronous>, transform_indices = @transform_3, window_bounds = array<i64: 1, 256>}, {pipeline_mode = #tpu.pipeline_mode<synchronous>, transform_indices = @transform_4, window_bounds = array<i64: 256, 256>}, {pipeline_mode = #tpu.pipeline_mode<synchronous>, transform_indices = @transform_5, window_bounds = array<i64: 1, 256>}, {transform_indices = @transform_6, window_bounds = array<i64: 8, 256>}]} {
    %c0 = arith.constant 0 : index
    %c0_0 = arith.constant 0 : index
    %0 = vector.load %arg1[%c0, %c0_0] : memref<8x32xf32, #tpu.memory_space<vmem>>, vector<8x32xf32>
    %1 = tpu.concatenate %0, %0, %0, %0, %0, %0, %0, %0 in 1 : vector<8x32xf32>, vector<8x32xf32>, vector<8x32xf32>, vector<8x32xf32>, vector<8x32xf32>, vector<8x32xf32>, vector<8x32xf32>, vector<8x32xf32> -> vector<8x256xf32>
    %c0_1 = arith.constant 0 : index
    %c0_2 = arith.constant 0 : index
    %2 = vector.load %arg2[%c0_1, %c0_2] : memref<8x256xf32, #tpu.memory_space<vmem>>, vector<8x256xf32>
    %3 = arith.mulf %1, %2 : vector<8x256xf32>
    %c0_3 = arith.constant 0 : index
    %c0_4 = arith.constant 0 : index
    %4 = vector.load %arg3[%c0_3, %c0_4] : memref<256x256xf32, #tpu.memory_space<vmem>>, vector<256x256xf32>
    %cst = arith.constant dense<0.000000e+00> : vector<8x256xf32>
    %5 = tpu.matmul %3, %4, %cst {dimension_numbers = #tpu.dot_dimension_numbers<[1], [0], [0], [1], [0, 0, 1, 1], [], []>} : vector<8x256xf32>, vector<256x256xf32>, vector<8x256xf32> -> vector<8x256xf32>
    %c0_5 = arith.constant 0 : index
    %c0_6 = arith.constant 0 : index
    %6 = vector.load %arg4[%c0_5, %c0_6] : memref<1x256xf32, #tpu.memory_space<vmem>>, vector<1x256xf32>
    %7 = vector.broadcast %6 : vector<1x256xf32> to vector<8x256xf32>
    %8 = arith.addf %5, %7 : vector<8x256xf32>
    %cst_7 = arith.constant 0.000000e+00 : f32
    %9 = vector.broadcast %cst_7 : f32 to vector<8x256xf32>
    %10 = arith.maximumf %8, %9 : vector<8x256xf32>
    %c0_8 = arith.constant 0 : index
    %c0_9 = arith.constant 0 : index
    %11 = vector.load %arg5[%c0_8, %c0_9] : memref<256x256xf32, #tpu.memory_space<vmem>>, vector<256x256xf32>
    %cst_10 = arith.constant dense<0.000000e+00> : vector<8x256xf32>
    %12 = tpu.matmul %10, %11, %cst_10 {dimension_numbers = #tpu.dot_dimension_numbers<[1], [0], [0], [1], [0, 0, 1, 1], [], []>} : vector<8x256xf32>, vector<256x256xf32>, vector<8x256xf32> -> vector<8x256xf32>
    %c0_11 = arith.constant 0 : index
    %c0_12 = arith.constant 0 : index
    %13 = vector.load %arg6[%c0_11, %c0_12] : memref<1x256xf32, #tpu.memory_space<vmem>>, vector<1x256xf32>
    %14 = vector.broadcast %13 : vector<1x256xf32> to vector<8x256xf32>
    %15 = arith.addf %12, %14 : vector<8x256xf32>
    %cst_13 = arith.constant 0.000000e+00 : f32
    %16 = vector.broadcast %cst_13 : f32 to vector<8x256xf32>
    %17 = arith.maximumf %15, %16 : vector<8x256xf32>
    %c0_14 = arith.constant 0 : index
    %c0_15 = arith.constant 0 : index
    %18 = vector.load %arg7[%c0_14, %c0_15] : memref<8x256xf32, #tpu.memory_space<vmem>>, vector<8x256xf32>
    tpu.vector_store %arg7[%c0_14, %c0_15], %17 {strides = array<i32>} : memref<8x256xf32, #tpu.memory_space<vmem>>, vector<8x256xf32>,
    return
  }
  func.func @transform_0(%arg0: i32) -> (i32, i32) {
    %c0_i32 = arith.constant 0 : i32
    %c0_i32_0 = arith.constant 0 : i32
    return %arg0, %c0_i32 : i32, i32
  }
  func.func @transform_1(%arg0: i32) -> (i32, i32) {
    %c0_i32 = arith.constant 0 : i32
    %c0_i32_0 = arith.constant 0 : i32
    return %arg0, %c0_i32 : i32, i32
  }
  func.func @transform_2(%arg0: i32) -> (i32, i32) {
    %c0_i32 = arith.constant 0 : i32
    %c0_i32_0 = arith.constant 0 : i32
    %c0_i32_1 = arith.constant 0 : i32
    return %c0_i32, %c0_i32_0 : i32, i32
  }
  func.func @transform_3(%arg0: i32) -> (i32, i32) {
    %c0_i32 = arith.constant 0 : i32
    %c0_i32_0 = arith.constant 0 : i32
    %c0_i32_1 = arith.constant 0 : i32
    return %c0_i32, %c0_i32_0 : i32, i32
  }
  func.func @transform_4(%arg0: i32) -> (i32, i32) {
    %c0_i32 = arith.constant 0 : i32
    %c0_i32_0 = arith.constant 0 : i32
    %c0_i32_1 = arith.constant 0 : i32
    return %c0_i32, %c0_i32_0 : i32, i32
  }
  func.func @transform_5(%arg0: i32) -> (i32, i32) {
    %c0_i32 = arith.constant 0 : i32
    %c0_i32_0 = arith.constant 0 : i32
    %c0_i32_1 = arith.constant 0 : i32
    return %c0_i32, %c0_i32_0 : i32, i32
  }
  func.func @transform_6(%arg0: i32) -> (i32, i32) {
    %c0_i32 = arith.constant 0 : i32
    %c0_i32_0 = arith.constant 0 : i32
    return %arg0, %c0_i32 : i32, i32
  }
}

</mosaic_0001>

<llo_original>
// kernel: tile.13
$region0: #{tile.13}
  #allocation0 [shape = 's32[1]{0}', space=sflag, size = 0x4, scoped, tag = 'scoped memory for tile.13']
  %s0 = inlined_call_operand.vmem [shape: f32[32], index: 0, kind: input, shape index: {}]
  %s1 = inlined_call_operand.vmem [shape: f32[8,32], index: 1, kind: output, shape index: {}]
  // Predicated region
  $region2: #{tile.13} parent=0 // pred_check
    _
  $region3: #{tile.13} parent=0 // pred_check_branch
    %3 = sbr.rel (0) target = $region5
  $region4: #{tile.13} parent=0 // pred_region
    _
  $region5: #{tile.13} parent=0 // pred_fallthru
    _
  %v4 = vld [vmem:[%s0] ss:$0 sm:$0xff]
  %5 = vst [vmem:[%s1] sm:$0xff] %v4

// kernel: tile.14
$region0: #{tile.14}
  %s0 = inlined_call_operand.vmem [shape: f32[8,32], index: 0, kind: input, shape index: {}]
  %s1 = inlined_call_operand.vmem [shape: f32[1,256], index: 1, kind: output, shape index: {}]
  $region1: #{tile.14} parent=0
    #allocation0 [shape = 'u8[8192]{0}', space=vmem, size = 0x2000, scoped, tag = 'scoped mem for output reshape']
    %s2 = smov 3
    %v3 = vld [vmem:[%s0] ss:$4 sm:%s2]
    %vm4 = vcmask 261120
    %5 = vst.msk [vmem:[#allocation0] ss:$8 sm:$0x3] %vm4, %v3
    %s6 = scalar_lea.vmem %s0, 3
    %s7 = smov 3
    %v8 = vld [vmem:[%s6] ss:$4 sm:%s7]
    %9 = vrot.lane.b32.xlu0 %v8, 96
    %v10 = vpop.permute.xlu0 %9
    %vm11 = vcmask 1048320
    %12 = vst.msk [vmem:[#allocation0] ss:$8 sm:$0x3] %vm11, %v10
    %s13 = scalar_lea.vmem %s0, 2
    %s14 = smov 3
    %v15 = vld [vmem:[%s13] ss:$4 sm:%s14]
    %16 = vrot.lane.b32.xlu0 %v15, 64
    %v17 = vpop.permute.xlu0 %16
    %vm18 = vcmask 785920
    %19 = vst.msk [vmem:[#allocation0] ss:$8 sm:$0x3] %vm18, %v17
    %s20 = scalar_lea.vmem %s0, 1
    %s21 = smov 3
    %v22 = vld [vmem:[%s20] ss:$4 sm:%s21]
    %23 = vrot.lane.b32.xlu0 %v22, 32
    %v24 = vpop.permute.xlu0 %23
    %vm25 = vcmask 523520
    %26 = vst.msk [vmem:[#allocation0] ss:$8 sm:$0x3] %vm25, %v24
    %s28 = sshll.u32 1, 1
    %s29 = ssub.s32 %s28, 1
    %v31 = vld [vmem:[#allocation0] sm:%s29]
    %s32 = sshll.u32 1, 1
    %s33 = ssub.s32 %s32, 1
    %34 = vst [vmem:[%s1] sm:%s33] %v31
    %s35 = scalar_lea.vmem [#allocation0], 8
    %v36 = vld [vmem:[%s35] sm:%s29]
    %s37 = sshll.u32 1, 1
    %s38 = ssub.s32 %s37, 1
    %s39 = scalar_lea.vmem %s1, 1
    %40 = vst [vmem:[%s39] sm:%s38] %v36

// kernel: edgenet_forward_batched.1
$region0: #{edgenet_forward_batched.1}
  #allocation0 [shape = 'u32[]', space=smem, size = 0x4, offset = 0x4, fixed_abs, tag = 'smem constant byte address 0x4 - core index']
  #allocation1 [shape = 'u32[144,128]{1,0:T(1,128)}', space=vmem, size = 0x12000, scoped, tag = 'internal scratch']
  %s0 = inlined_call_operand.vmem [shape: f32[16,32], index: 0, kind: input, shape index: {}]
  %s1 = inlined_call_operand.vmem [shape: f32[16,256], index: 1, kind: input, shape index: {}]
  %s2 = inlined_call_operand.vmem [shape: f32[256,256], index: 2, kind: input, shape index: {}]
  %s3 = inlined_call_operand.vmem [shape: f32[1,256], index: 3, kind: input, shape index: {}]
  %s4 = inlined_call_operand.vmem [shape: f32[256,256], index: 4, kind: input, shape index: {}]
  %s5 = inlined_call_operand.vmem [shape: f32[1,256], index: 5, kind: input, shape index: {}]
  %s6 = inlined_call_operand.vmem [shape: f32[16,256], index: 6, kind: output, shape index: {}]
  %s7 = sld [smem:[#allocation0]]
  $region57: #{edgenet_forward_batched.1} parent=0
    _
  %s9 = ssub.s32 1, %s7
  %s10 = scalar_select 0, %s9, %s7
  loop: start=0, step=1, limit=4
  $region2: #{edgenet_forward_batched.1} parent=0 // loop_pre_header
    _
  $region3: #{edgenet_forward_batched.1} parent=0 // loop_header
    %s12 = sphi 0, %s16
    %p13 = scmp.ge.s32.totalorder %s12, 4
    %s22 = sphi 0, %s24
    %s25 = sphi 0, %s22
    %s26 = sphi 0, %s25
    %s42 = sphi 0, %s26
    %s48 = sphi 0, %s50
    %s51 = sphi 0, %s48
    %s52 = sphi 0, %s51
    %s68 = sphi 0, %s52
    %s72 = sphi 0, %s72
    %s74 = sphi 0, %s72
    %s75 = sphi 0, %s74
    %s89 = sphi 0, %s75
    %s93 = sphi 0, %s93
    %s95 = sphi 0, %s93
    %s96 = sphi 0, %s95
    %s110 = sphi 0, %s96
    %s114 = sphi 0, %s114
    %s116 = sphi 0, %s114
    %s117 = sphi 0, %s116
    %s131 = sphi 0, %s117
    %s135 = sphi 0, %s135
    %s137 = sphi 0, %s135
    %s138 = sphi 0, %s137
    %s152 = sphi 0, %s138
    %s158 = sphi 0, %s160
    %s161 = sphi 0, %s158
    %s162 = sphi 0, %s161
    %s178 = sphi 0, %s162
  $region4: #{edgenet_forward_batched.1} parent=0 // loop_header_branch
    %15 = sbr.rel (%p13) target = $region8
  $region5: #{edgenet_forward_batched.1} parent=0 // loop_body
    %s17 = ssub.s32 %s12, 1
    %s18 = ssub.s32 %s12, 2
    %s19 = sadd.s32 %s12, 1
    %s20 = ssub.s32 %s12, %s19
    %p21 = scmp.eq.s32.totalorder %s20, 0
    %s23 = sadd.s32 %s22, 1
    %s24 = scalar_select %p21, %s22, %s23
    %p27 = pneg %p21
    %p28 = scmp.eq.s32.totalorder %s12, 1
    %p29 = por %p27, %p28
    %p30 = scmp.ne.s32.totalorder %s22, %s25
    %p31 = scmp.eq.s32.totalorder %s12, 0
    %p32 = por %p30, %p31
    %p33 = scmp.ne.s32.totalorder %s22, %s25
    %p34 = scmp.eq.s32.totalorder %s17, 1
    %p35 = por %p33, %p34
    %p36 = scmp.ne.s32.totalorder %s25, %s26
    %p37 = scmp.eq.s32.totalorder %s17, 0
    %p38 = por %p36, %p37
    %p39 = scmp.ne.s32.totalorder %s25, %s26
    %p40 = scmp.eq.s32.totalorder %s18, 1
    %p41 = por %p39, %p40
    %p43 = scmp.ne.s32.totalorder %s26, %s42
    %p44 = scmp.eq.s32.totalorder %s18, 0
    %p45 = por %p43, %p44
    %s46 = ssub.s32 %s12, %s19
    %p47 = scmp.eq.s32.totalorder %s46, 0
    %s49 = sadd.s32 %s48, 1
    %s50 = scalar_select %p47, %s48, %s49
    %p53 = pneg %p47
    %p54 = scmp.eq.s32.totalorder %s12, 1
    %p55 = por %p53, %p54
    %p56 = scmp.ne.s32.totalorder %s48, %s51
    %p57 = scmp.eq.s32.totalorder %s12, 0
    %p58 = por %p56, %p57
    %p59 = scmp.ne.s32.totalorder %s48, %s51
    %p60 = scmp.eq.s32.totalorder %s17, 1
    %p61 = por %p59, %p60
    %p62 = scmp.ne.s32.totalorder %s51, %s52
    %p63 = scmp.eq.s32.totalorder %s17, 0
    %p64 = por %p62, %p63
    %p65 = scmp.ne.s32.totalorder %s51, %s52
    %p66 = scmp.eq.s32.totalorder %s18, 1
    %p67 = por %p65, %p66
    %p69 = scmp.ne.s32.totalorder %s52, %s68
    %p70 = scmp.eq.s32.totalorder %s18, 0
    %p71 = por %p69, %p70
    %s73 = sadd.s32 %s72, 1
    %p76 = scmp.eq.s32.totalorder %s12, 1
    %p77 = scmp.ne.s32.totalorder %s72, %s74
    %p78 = scmp.eq.s32.totalorder %s12, 0
    %p79 = por %p77, %p78
    %p80 = scmp.ne.s32.totalorder %s72, %s74
    %p81 = scmp.eq.s32.totalorder %s17, 1
    %p82 = por %p80, %p81
    %p83 = scmp.ne.s32.totalorder %s74, %s75
    %p84 = scmp.eq.s32.totalorder %s17, 0
    %p85 = por %p83, %p84
    %p86 = scmp.ne.s32.totalorder %s74, %s75
    %p87 = scmp.eq.s32.totalorder %s18, 1
    %p88 = por %p86, %p87
    %p90 = scmp.ne.s32.totalorder %s75, %s89
    %p91 = scmp.eq.s32.totalorder %s18, 0
    %p92 = por %p90, %p91
    %s94 = sadd.s32 %s93, 1
    %p97 = scmp.eq.s32.totalorder %s12, 1
    %p98 = scmp.ne.s32.totalorder %s93, %s95
    %p99 = scmp.eq.s32.totalorder %s12, 0
    %p100 = por %p98, %p99
    %p101 = scmp.ne.s32.totalorder %s93, %s95
    %p102 = scmp.eq.s32.totalorder %s17, 1
    %p103 = por %p101, %p102
    %p104 = scmp.ne.s32.totalorder %s95, %s96
    %p105 = scmp.eq.s32.totalorder %s17, 0
    %p106 = por %p104, %p105
    %p107 = scmp.ne.s32.totalorder %s95, %s96
    %p108 = scmp.eq.s32.totalorder %s18, 1
    %p109 = por %p107, %p108
    %p111 = scmp.ne.s32.totalorder %s96, %s110
    %p112 = scmp.eq.s32.totalorder %s18, 0
    %p113 = por %p111, %p112
    %s115 = sadd.s32 %s114, 1
    %p118 = scmp.eq.s32.totalorder %s12, 1
    %p119 = scmp.ne.s32.totalorder %s114, %s116
    %p120 = scmp.eq.s32.totalorder %s12, 0
    %p121 = por %p119, %p120
    %p122 = scmp.ne.s32.totalorder %s114, %s116
    %p123 = scmp.eq.s32.totalorder %s17, 1
    %p124 = por %p122, %p123
    %p125 = scmp.ne.s32.totalorder %s116, %s117
    %p126 = scmp.eq.s32.totalorder %s17, 0
    %p127 = por %p125, %p126
    %p128 = scmp.ne.s32.totalorder %s116, %s117
    %p129 = scmp.eq.s32.totalorder %s18, 1
    %p130 = por %p128, %p129
    %p132 = scmp.ne.s32.totalorder %s117, %s131
    %p133 = scmp.eq.s32.totalorder %s18, 0
    %p134 = por %p132, %p133
    %s136 = sadd.s32 %s135, 1
    %p139 = scmp.eq.s32.totalorder %s12, 1
    %p140 = scmp.ne.s32.totalorder %s135, %s137
    %p141 = scmp.eq.s32.totalorder %s12, 0
    %p142 = por %p140, %p141
    %p143 = scmp.ne.s32.totalorder %s135, %s137
    %p144 = scmp.eq.s32.totalorder %s17, 1
    %p145 = por %p143, %p144
    %p146 = scmp.ne.s32.totalorder %s137, %s138
    %p147 = scmp.eq.s32.totalorder %s17, 0
    %p148 = por %p146, %p147
    %p149 = scmp.ne.s32.totalorder %s137, %s138
    %p150 = scmp.eq.s32.totalorder %s18, 1
    %p151 = por %p149, %p150
    %p153 = scmp.ne.s32.totalorder %s138, %s152
    %p154 = scmp.eq.s32.totalorder %s18, 0
    %p155 = por %p153, %p154
    %s156 = ssub.s32 %s12, %s19
    %p157 = scmp.eq.s32.totalorder %s156, 0
    %s159 = sadd.s32 %s158, 1
    %s160 = scalar_select %p157, %s158, %s159
    %p163 = pneg %p157
    %p164 = scmp.eq.s32.totalorder %s12, 1
    %p165 = por %p163, %p164
    %p166 = scmp.ne.s32.totalorder %s158, %s161
    %p167 = scmp.eq.s32.totalorder %s12, 0
    %p168 = por %p166, %p167
    %p169 = scmp.ne.s32.totalorder %s158, %s161
    %p170 = scmp.eq.s32.totalorder %s17, 1
    %p171 = por %p169, %p170
    %p172 = scmp.ne.s32.totalorder %s161, %s162
    %p173 = scmp.eq.s32.totalorder %s17, 0
    %p174 = por %p172, %p173
    %p175 = scmp.ne.s32.totalorder %s161, %s162
    %p176 = scmp.eq.s32.totalorder %s18, 1
    %p177 = por %p175, %p176
    %p179 = scmp.ne.s32.totalorder %s162, %s178
    %p180 = scmp.eq.s32.totalorder %s18, 0
    %p181 = por %p179, %p180
    %p182 = scmp.le.s32.totalorder 1, %s12
    %p183 = scmp.lt.s32.totalorder %s12, 3
    %p184 = pnand %p182, %p183
    %p185 = pneg %p184
    // Predicated region
    $region9: #{edgenet_forward_batched.1} parent=5 // pred_check
      _
    $region10: #{edgenet_forward_batched.1} parent=5 // pred_check_branch
      %187 = sbr.rel (%p184) target = $region12
    $region11: #{edgenet_forward_batched.1} parent=5 // pred_region
      %s188 = ssub.s32 %s12, 1
      // Predicated region
      $region13: #{edgenet_forward_batched.1} parent=11 // pred_check
        %p189 = pneg %p85
      $region14: #{edgenet_forward_batched.1} parent=11 // pred_check_branch
        %191 = sbr.rel (%p189) target = $region16
      $region15: #{edgenet_forward_batched.1} parent=11 // pred_region
        _
      $region16: #{edgenet_forward_batched.1} parent=11 // pred_fallthru
        _
      // Predicated region
      $region17: #{edgenet_forward_batched.1} parent=11 // pred_check
        %p192 = pneg %p106
      $region18: #{edgenet_forward_batched.1} parent=11 // pred_check_branch
        %194 = sbr.rel (%p192) target = $region20
      $region19: #{edgenet_forward_batched.1} parent=11 // pred_region
        _
      $region20: #{edgenet_forward_batched.1} parent=11 // pred_fallthru
        _
      // Predicated region
      $region21: #{edgenet_forward_batched.1} parent=11 // pred_check
        %p195 = pneg %p127
      $region22: #{edgenet_forward_batched.1} parent=11 // pred_check_branch
        %197 = sbr.rel (%p195) target = $region24
      $region23: #{edgenet_forward_batched.1} parent=11 // pred_region
        _
      $region24: #{edgenet_forward_batched.1} parent=11 // pred_fallthru
        _
      // Predicated region
      $region25: #{edgenet_forward_batched.1} parent=11 // pred_check
        %p198 = pneg %p148
      $region26: #{edgenet_forward_batched.1} parent=11 // pred_check_branch
        %200 = sbr.rel (%p198) target = $region28
      $region27: #{edgenet_forward_batched.1} parent=11 // pred_region
        _
      $region28: #{edgenet_forward_batched.1} parent=11 // pred_fallthru
        _
    $region12: #{edgenet_forward_batched.1} parent=5 // pred_fallthru
      _
    %p201 = scmp.lt.s32.totalorder %s12, 2
    // Predicated region
    $region29: #{edgenet_forward_batched.1} parent=5 // pred_check
      %p202 = pneg %p201
    $region30: #{edgenet_forward_batched.1} parent=5 // pred_check_branch
      %204 = sbr.rel (%p202) target = $region32
    $region31: #{edgenet_forward_batched.1} parent=5 // pred_region
      // Predicated region
      $region33: #{edgenet_forward_batched.1} parent=31 // pred_check
        %p205 = pneg %p32
      $region34: #{edgenet_forward_batched.1} parent=31 // pred_check_branch
        %207 = sbr.rel (%p205) target = $region36
      $region35: #{edgenet_forward_batched.1} parent=31 // pred_region
        %p208 = scmp.lt.s32.totalorder %s12, 1
        %s209 = scalar_select %p208, %s12, 1
        %s210 = smul.addr %s209, 8
        %s211 = scalar_lea.vmem %s0, %s210
      $region36: #{edgenet_forward_batched.1} parent=31 // pred_fallthru
        _
      // Predicated region
      $region37: #{edgenet_forward_batched.1} parent=31 // pred_check
        %p212 = pneg %p58
      $region38: #{edgenet_forward_batched.1} parent=31 // pred_check_branch
        %214 = sbr.rel (%p212) target = $region40
      $region39: #{edgenet_forward_batched.1} parent=31 // pred_region
        %p215 = scmp.lt.s32.totalorder %s12, 1
        %s216 = scalar_select %p215, %s12, 1
        %s217 = smul.addr %s216, 2
        %s218 = smul.addr %s217, 8
        %s219 = scalar_lea.vmem %s1, %s218
      $region40: #{edgenet_forward_batched.1} parent=31 // pred_fallthru
        _
    $region32: #{edgenet_forward_batched.1} parent=5 // pred_fallthru
      _
    %p220 = scmp.le.s32.totalorder 1, %s12
    %p221 = scmp.lt.s32.totalorder %s12, 3
    %p222 = pnand %p220, %p221
    %p223 = pneg %p222
    // Predicated region
    $region41: #{edgenet_forward_batched.1} parent=5 // pred_check
      _
    $region42: #{edgenet_forward_batched.1} parent=5 // pred_check_branch
      %225 = sbr.rel (%p222) target = $region44
    $region43: #{edgenet_forward_batched.1} parent=5 // pred_region
      %s226 = ssub.s32 %s12, 1
      %p227 = scmp.lt.s32.totalorder %s17, 1
      %s228 = scalar_select %p227, %s17, 1
      %s229 = smul.addr %s228, 8
      %s230 = scalar_lea.vmem %s0, %s229
      %p231 = pneg %p38
      %p232 = pneg %p35
      %p233 = scmp.lt.s32.totalorder %s17, 1
      %s234 = scalar_select %p233, %s17, 1
      %s235 = smul.addr %s234, 2
      %s236 = smul.addr %s235, 8
      %s237 = scalar_lea.vmem %s1, %s236
      %p238 = pneg %p64
      %p239 = pneg %p61
      %p240 = pneg %p85
      %p241 = pneg %p82
      %p242 = pneg %p106
      %p243 = pneg %p103
      %p244 = pneg %p127
      %p245 = pneg %p124
      %p246 = pneg %p148
      %p247 = pneg %p145
      %p248 = pneg %p174
      %p249 = pneg %p171
      %p250 = scmp.lt.s32.totalorder %s17, 1
      %s251 = scalar_select %p250, %s17, 1
      %s252 = smul.addr %s251, 2
      %s253 = smul.addr %s252, 8
      %s254 = scalar_lea.vmem %s6, %s253
      %p255 = scmp.lt.s32.totalorder %s17, 1
      %s256 = scalar_select %p255, %s17, 1
      %s257 = smul.addr %s256, 8
      %s258 = scalar_lea.vmem %s0, %s257
      %p259 = scmp.lt.s32.totalorder %s17, 1
      %s260 = scalar_select %p259, %s17, 1
      %s261 = smul.addr %s260, 2
      %s262 = smul.addr %s261, 8
      %s263 = scalar_lea.vmem %s1, %s262
      %p264 = scmp.lt.s32.totalorder %s17, 1
      %s265 = scalar_select %p264, %s17, 1
      %s266 = smul.addr %s265, 2
      %s267 = smul.addr %s266, 8
      %s268 = scalar_lea.vmem %s6, %s267
      %v269 = vld [vmem:[%s258] sm:$0xff]
      %271 = vrot.lane.b32.xlu0 %v269, 32
      %v272 = vpop.permute.xlu0 %271
      %274 = vrot.lane.b32.xlu0 %v269, 64
      %v275 = vpop.permute.xlu0 %274
      %277 = vrot.lane.b32.xlu0 %v269, 96
      %v278 = vpop.permute.xlu0 %277
      %vm280 = vcmask 261120
      %v281 = vsel %vm280, %v269, %v272
      %vm282 = vcmask 523264
      %v283 = vsel %vm282, %v281, %v275
      %vm284 = vcmask 785408
      %v285 = vsel %vm284, %v283, %v278
      %v286 = vld [vmem:[%s263] sm:$0xff]
      %v287 = vld [vmem:[%s263 + $0x8] sm:$0xff]
      %v288 = vmul.f32 %v285, %v286
      %v289 = vmul.f32 %v285, %v287
      %v290 = vld [vmem:[%s2] sm:$0xff]
      %v291 = vld [vmem:[%s2 + $0x8] sm:$0xff]
      %v292 = vld [vmem:[%s2 + $0x10] sm:$0xff]
      %v293 = vld [vmem:[%s2 + $0x18] sm:$0xff]
      %v294 = vld [vmem:[%s2 + $0x20] sm:$0xff]
      %v295 = vld [vmem:[%s2 + $0x28] sm:$0xff]
      %v296 = vld [vmem:[%s2 + $0x30] sm:$0xff]
      %v297 = vld [vmem:[%s2 + $0x38] sm:$0xff]
      %v298 = vld [vmem:[%s2 + $0x40] sm:$0xff]
      %v299 = vld [vmem:[%s2 + $0x48] sm:$0xff]
      %v300 = vld [vmem:[%s2 + $0x50] sm:$0xff]
      %v301 = vld [vmem:[%s2 + $0x58] sm:$0xff]
      %v302 = vld [vmem:[%s2 + $0x60] sm:$0xff]
      %v303 = vld [vmem:[%s2 + $0x68] sm:$0xff]
      %v304 = vld [vmem:[%s2 + $0x70] sm:$0xff]
      %v305 = vld [vmem:[%s2 + $0x78] sm:$0xff]
      %v306 = vld [vmem:[%s2 + $0x80] sm:$0xff]
      %v307 = vld [vmem:[%s2 + $0x88] sm:$0xff]
      %v308 = vld [vmem:[%s2 + $0x90] sm:$0xff]
      %v309 = vld [vmem:[%s2 + $0x98] sm:$0xff]
      %v310 = vld [vmem:[%s2 + $0xa0] sm:$0xff]
      %v311 = vld [vmem:[%s2 + $0xa8] sm:$0xff]
      %v312 = vld [vmem:[%s2 + $0xb0] sm:$0xff]
      %v313 = vld [vmem:[%s2 + $0xb8] sm:$0xff]
      %v314 = vld [vmem:[%s2 + $0xc0] sm:$0xff]
      %v315 = vld [vmem:[%s2 + $0xc8] sm:$0xff]
      %v316 = vld [vmem:[%s2 + $0xd0] sm:$0xff]
      %v317 = vld [vmem:[%s2 + $0xd8] sm:$0xff]
      %v318 = vld [vmem:[%s2 + $0xe0] sm:$0xff]
      %v319 = vld [vmem:[%s2 + $0xe8] sm:$0xff]
      %v320 = vld [vmem:[%s2 + $0xf0] sm:$0xff]
      %v321 = vld [vmem:[%s2 + $0xf8] sm:$0xff]
      %v322 = vld [vmem:[%s2 + $0x100] sm:$0xff]
      %v323 = vld [vmem:[%s2 + $0x108] sm:$0xff]
      %v324 = vld [vmem:[%s2 + $0x110] sm:$0xff]
      %v325 = vld [vmem:[%s2 + $0x118] sm:$0xff]
      %v326 = vld [vmem:[%s2 + $0x120] sm:$0xff]
      %v327 = vld [vmem:[%s2 + $0x128] sm:$0xff]
      %v328 = vld [vmem:[%s2 + $0x130] sm:$0xff]
      %v329 = vld [vmem:[%s2 + $0x138] sm:$0xff]
      %v330 = vld [vmem:[%s2 + $0x140] sm:$0xff]
      %v331 = vld [vmem:[%s2 + $0x148] sm:$0xff]
      %v332 = vld [vmem:[%s2 + $0x150] sm:$0xff]
      %v333 = vld [vmem:[%s2 + $0x158] sm:$0xff]
      %v334 = vld [vmem:[%s2 + $0x160] sm:$0xff]
      %v335 = vld [vmem:[%s2 + $0x168] sm:$0xff]
      %v336 = vld [vmem:[%s2 + $0x170] sm:$0xff]
      %v337 = vld [vmem:[%s2 + $0x178] sm:$0xff]
      %v338 = vld [vmem:[%s2 + $0x180] sm:$0xff]
      %v339 = vld [vmem:[%s2 + $0x188] sm:$0xff]
      %v340 = vld [vmem:[%s2 + $0x190] sm:$0xff]
      %v341 = vld [vmem:[%s2 + $0x198] sm:$0xff]
      %v342 = vld [vmem:[%s2 + $0x1a0] sm:$0xff]
      %v343 = vld [vmem:[%s2 + $0x1a8] sm:$0xff]
      %v344 = vld [vmem:[%s2 + $0x1b0] sm:$0xff]
      %v345 = vld [vmem:[%s2 + $0x1b8] sm:$0xff]
      %v346 = vld [vmem:[%s2 + $0x1c0] sm:$0xff]
      %v347 = vld [vmem:[%s2 + $0x1c8] sm:$0xff]
      %v348 = vld [vmem:[%s2 + $0x1d0] sm:$0xff]
      %v349 = vld [vmem:[%s2 + $0x1d8] sm:$0xff]
      %v350 = vld [vmem:[%s2 + $0x1e0] sm:$0xff]
      %v351 = vld [vmem:[%s2 + $0x1e8] sm:$0xff]
      %v352 = vld [vmem:[%s2 + $0x1f0] sm:$0xff]
      %v353 = vld [vmem:[%s2 + $0x1f8] sm:$0xff]
      %v354 = vld [vmem:[%s3] sm:$0x3]
      %v356 = vlaneseq
      %v357 = vshrl.u32 %v356, 7
      %v358 = vsub.s32 0, %v357
      %v359 = vrot.slane %v354, %v358
      %v360 = vlaneseq
      %v361 = vshrl.u32 %v360, 7
      %v362 = vsub.s32 1, %v361
      %v363 = vrot.slane %v354, %v362
      %366 = vmatprep.subr.mxu0 %v321
      %367 = vmatpush1.msra.mxu0 %v320
      %368 = vmatprep.subr.mxu0 %v319
      %369 = vmatpush1.msra.mxu0 %v318
      %370 = vmatprep.subr.mxu0 %v317
      %371 = vmatpush1.msra.mxu0 %v316
      %372 = vmatprep.subr.mxu0 %v315
      %373 = vmatpush1.msra.mxu0 %v314
      %374 = vmatprep.subr.mxu0 %v313
      %375 = vmatpush1.msra.mxu0 %v312
      %376 = vmatprep.subr.mxu0 %v311
      %377 = vmatpush1.msra.mxu0 %v310
      %378 = vmatprep.subr.mxu0 %v309
      %379 = vmatpush1.msra.mxu0 %v308
      %380 = vmatprep.subr.mxu0 %v307
      %381 = vmatpush1.msra.mxu0 %v306
      %382 = vmatprep.subr.mxu0 %v305
      %383 = vmatpush1.msra.mxu0 %v304
      %384 = vmatprep.subr.mxu0 %v303
      %385 = vmatpush1.msra.mxu0 %v302
      %386 = vmatprep.subr.mxu0 %v301
      %387 = vmatpush1.msra.mxu0 %v300
      %388 = vmatprep.subr.mxu0 %v299
      %389 = vmatpush1.msra.mxu0 %v298
      %390 = vmatprep.subr.mxu0 %v297
      %391 = vmatpush1.msra.mxu0 %v296
      %392 = vmatprep.subr.mxu0 %v295
      %393 = vmatpush1.msra.mxu0 %v294
      %394 = vmatprep.subr.mxu0 %v293
      %395 = vmatpush1.msra.mxu0 %v292
      %396 = vmatprep.subr.mxu0 %v291
      %397 = vmatpush1.msra.mxu0 %v290
      %398 = vmatprep.subr.mxu0 %v353
      %399 = vmatpush2.msra.mxu0 %v352
      %400 = vmatprep.subr.mxu0 %v351
      %401 = vmatpush2.msra.mxu0 %v350
      %402 = vmatprep.subr.mxu0 %v349
      %403 = vmatpush2.msra.mxu0 %v348
      %404 = vmatprep.subr.mxu0 %v347
      %405 = vmatpush2.msra.mxu0 %v346
      %406 = vmatprep.subr.mxu0 %v345
      %407 = vmatpush2.msra.mxu0 %v344
      %408 = vmatprep.subr.mxu0 %v343
      %409 = vmatpush2.msra.mxu0 %v342
      %410 = vmatprep.subr.mxu0 %v341
      %411 = vmatpush2.msra.mxu0 %v340
      %412 = vmatprep.subr.mxu0 %v339
      %413 = vmatpush2.msra.mxu0 %v338
      %414 = vmatprep.subr.mxu0 %v337
      %415 = vmatpush2.msra.mxu0 %v336
      %416 = vmatprep.subr.mxu0 %v335
      %417 = vmatpush2.msra.mxu0 %v334
      %418 = vmatprep.subr.mxu0 %v333
      %419 = vmatpush2.msra.mxu0 %v332
      %420 = vmatprep.subr.mxu0 %v331
      %421 = vmatpush2.msra.mxu0 %v330
      %422 = vmatprep.subr.mxu0 %v329
      %423 = vmatpush2.msra.mxu0 %v328
      %424 = vmatprep.subr.mxu0 %v327
      %425 = vmatpush2.msra.mxu0 %v326
      %426 = vmatprep.subr.mxu0 %v325
      %427 = vmatpush2.msra.mxu0 %v324
      %428 = vmatprep.subr.mxu0 %v323
      %429 = vmatpush2.msra.mxu0 %v322
      %430 = vmatprep.mubr.f32.mxu0 %v289
      %431 = vmatmul.mubr.f32.gmra.mxu0 %v288
      %v432 = vpop.f32.mrf.mxu0
      %v433 = vadd.f32 %v359, %v432
      %v434 = vpop.f32.mrf.mxu0
      %v435 = vadd.f32 %v363, %v434
      %436 = vdwg.mxu0
      %v437 = vmax.f32 %v433, 0.0
      %v438 = vmax.f32 %v435, 0.0
      %v439 = vld [vmem:[%s4] sm:$0xff]
      %v440 = vld [vmem:[%s4 + $0x8] sm:$0xff]
      %v441 = vld [vmem:[%s4 + $0x10] sm:$0xff]
      %v442 = vld [vmem:[%s4 + $0x18] sm:$0xff]
      %v443 = vld [vmem:[%s4 + $0x20] sm:$0xff]
      %v444 = vld [vmem:[%s4 + $0x28] sm:$0xff]
      %v445 = vld [vmem:[%s4 + $0x30] sm:$0xff]
      %v446 = vld [vmem:[%s4 + $0x38] sm:$0xff]
      %v447 = vld [vmem:[%s4 + $0x40] sm:$0xff]
      %v448 = vld [vmem:[%s4 + $0x48] sm:$0xff]
      %v449 = vld [vmem:[%s4 + $0x50] sm:$0xff]
      %v450 = vld [vmem:[%s4 + $0x58] sm:$0xff]
      %v451 = vld [vmem:[%s4 + $0x60] sm:$0xff]
      %v452 = vld [vmem:[%s4 + $0x68] sm:$0xff]
      %v453 = vld [vmem:[%s4 + $0x70] sm:$0xff]
      %v454 = vld [vmem:[%s4 + $0x78] sm:$0xff]
      %v455 = vld [vmem:[%s4 + $0x80] sm:$0xff]
      %v456 = vld [vmem:[%s4 + $0x88] sm:$0xff]
      %v457 = vld [vmem:[%s4 + $0x90] sm:$0xff]
      %v458 = vld [vmem:[%s4 + $0x98] sm:$0xff]
      %v459 = vld [vmem:[%s4 + $0xa0] sm:$0xff]
      %v460 = vld [vmem:[%s4 + $0xa8] sm:$0xff]
      %v461 = vld [vmem:[%s4 + $0xb0] sm:$0xff]
      %v462 = vld [vmem:[%s4 + $0xb8] sm:$0xff]
      %v463 = vld [vmem:[%s4 + $0xc0] sm:$0xff]
      %v464 = vld [vmem:[%s4 + $0xc8] sm:$0xff]
      %v465 = vld [vmem:[%s4 + $0xd0] sm:$0xff]
      %v466 = vld [vmem:[%s4 + $0xd8] sm:$0xff]
      %v467 = vld [vmem:[%s4 + $0xe0] sm:$0xff]
      %v468 = vld [vmem:[%s4 + $0xe8] sm:$0xff]
      %v469 = vld [vmem:[%s4 + $0xf0] sm:$0xff]
      %v470 = vld [vmem:[%s4 + $0xf8] sm:$0xff]
      %v471 = vld [vmem:[%s4 + $0x100] sm:$0xff]
      %v472 = vld [vmem:[%s4 + $0x108] sm:$0xff]
      %v473 = vld [vmem:[%s4 + $0x110] sm:$0xff]
      %v474 = vld [vmem:[%s4 + $0x118] sm:$0xff]
      %v475 = vld [vmem:[%s4 + $0x120] sm:$0xff]
      %v476 = vld [vmem:[%s4 + $0x128] sm:$0xff]
      %v477 = vld [vmem:[%s4 + $0x130] sm:$0xff]
      %v478 = vld [vmem:[%s4 + $0x138] sm:$0xff]
      %v479 = vld [vmem:[%s4 + $0x140] sm:$0xff]
      %v480 = vld [vmem:[%s4 + $0x148] sm:$0xff]
      %v481 = vld [vmem:[%s4 + $0x150] sm:$0xff]
      %v482 = vld [vmem:[%s4 + $0x158] sm:$0xff]
      %v483 = vld [vmem:[%s4 + $0x160] sm:$0xff]
      %v484 = vld [vmem:[%s4 + $0x168] sm:$0xff]
      %v485 = vld [vmem:[%s4 + $0x170] sm:$0xff]
      %v486 = vld [vmem:[%s4 + $0x178] sm:$0xff]
      %v487 = vld [vmem:[%s4 + $0x180] sm:$0xff]
      %v488 = vld [vmem:[%s4 + $0x188] sm:$0xff]
      %v489 = vld [vmem:[%s4 + $0x190] sm:$0xff]
      %v490 = vld [vmem:[%s4 + $0x198] sm:$0xff]
      %v491 = vld [vmem:[%s4 + $0x1a0] sm:$0xff]
      %v492 = vld [vmem:[%s4 + $0x1a8] sm:$0xff]
      %v493 = vld [vmem:[%s4 + $0x1b0] sm:$0xff]
      %v494 = vld [vmem:[%s4 + $0x1b8] sm:$0xff]
      %v495 = vld [vmem:[%s4 + $0x1c0] sm:$0xff]
      %v496 = vld [vmem:[%s4 + $0x1c8] sm:$0xff]
      %v497 = vld [vmem:[%s4 + $0x1d0] sm:$0xff]
      %v498 = vld [vmem:[%s4 + $0x1d8] sm:$0xff]
      %v499 = vld [vmem:[%s4 + $0x1e0] sm:$0xff]
      %v500 = vld [vmem:[%s4 + $0x1e8] sm:$0xff]
      %v501 = vld [vmem:[%s4 + $0x1f0] sm:$0xff]
      %v502 = vld [vmem:[%s4 + $0x1f8] sm:$0xff]
      %v503 = vld [vmem:[%s5] sm:$0x3]
      %v505 = vlaneseq
      %v506 = vshrl.u32 %v505, 7
      %v507 = vsub.s32 0, %v506
      %v508 = vrot.slane %v503, %v507
      %v509 = vlaneseq
      %v510 = vshrl.u32 %v509, 7
      %v511 = vsub.s32 1, %v510
      %v512 = vrot.slane %v503, %v511
      %515 = vmatprep.subr.mxu0 %v470
      %516 = vmatpush1.msra.mxu0 %v469
      %517 = vmatprep.subr.mxu0 %v468
      %518 = vmatpush1.msra.mxu0 %v467
      %519 = vmatprep.subr.mxu0 %v466
      %520 = vmatpush1.msra.mxu0 %v465
      %521 = vmatprep.subr.mxu0 %v464
      %522 = vmatpush1.msra.mxu0 %v463
      %523 = vmatprep.subr.mxu0 %v462
      %524 = vmatpush1.msra.mxu0 %v461
      %525 = vmatprep.subr.mxu0 %v460
      %526 = vmatpush1.msra.mxu0 %v459
      %527 = vmatprep.subr.mxu0 %v458
      %528 = vmatpush1.msra.mxu0 %v457
      %529 = vmatprep.subr.mxu0 %v456
      %530 = vmatpush1.msra.mxu0 %v455
      %531 = vmatprep.subr.mxu0 %v454
      %532 = vmatpush1.msra.mxu0 %v453
      %533 = vmatprep.subr.mxu0 %v452
      %534 = vmatpush1.msra.mxu0 %v451
      %535 = vmatprep.subr.mxu0 %v450
      %536 = vmatpush1.msra.mxu0 %v449
      %537 = vmatprep.subr.mxu0 %v448
      %538 = vmatpush1.msra.mxu0 %v447
      %539 = vmatprep.subr.mxu0 %v446
      %540 = vmatpush1.msra.mxu0 %v445
      %541 = vmatprep.subr.mxu0 %v444
      %542 = vmatpush1.msra.mxu0 %v443
      %543 = vmatprep.subr.mxu0 %v442
      %544 = vmatpush1.msra.mxu0 %v441
      %545 = vmatprep.subr.mxu0 %v440
      %546 = vmatpush1.msra.mxu0 %v439
      %547 = vmatprep.subr.mxu0 %v502
      %548 = vmatpush2.msra.mxu0 %v501
      %549 = vmatprep.subr.mxu0 %v500
      %550 = vmatpush2.msra.mxu0 %v499
      %551 = vmatprep.subr.mxu0 %v498
      %552 = vmatpush2.msra.mxu0 %v497
      %553 = vmatprep.subr.mxu0 %v496
      %554 = vmatpush2.msra.mxu0 %v495
      %555 = vmatprep.subr.mxu0 %v494
      %556 = vmatpush2.msra.mxu0 %v493
      %557 = vmatprep.subr.mxu0 %v492
      %558 = vmatpush2.msra.mxu0 %v491
      %559 = vmatprep.subr.mxu0 %v490
      %560 = vmatpush2.msra.mxu0 %v489
      %561 = vmatprep.subr.mxu0 %v488
      %562 = vmatpush2.msra.mxu0 %v487
      %563 = vmatprep.subr.mxu0 %v486
      %564 = vmatpush2.msra.mxu0 %v485
      %565 = vmatprep.subr.mxu0 %v484
      %566 = vmatpush2.msra.mxu0 %v483
      %567 = vmatprep.subr.mxu0 %v482
      %568 = vmatpush2.msra.mxu0 %v481
      %569 = vmatprep.subr.mxu0 %v480
      %570 = vmatpush2.msra.mxu0 %v479
      %571 = vmatprep.subr.mxu0 %v478
      %572 = vmatpush2.msra.mxu0 %v477
      %573 = vmatprep.subr.mxu0 %v476
      %574 = vmatpush2.msra.mxu0 %v475
      %575 = vmatprep.subr.mxu0 %v474
      %576 = vmatpush2.msra.mxu0 %v473
      %577 = vmatprep.subr.mxu0 %v472
      %578 = vmatpush2.msra.mxu0 %v471
      %579 = vmatprep.mubr.f32.mxu0 %v438
      %580 = vmatmul.mubr.f32.gmra.mxu0 %v437
      %v581 = vpop.f32.mrf.mxu0
      %v582 = vadd.f32 %v508, %v581
      %v583 = vpop.f32.mrf.mxu0
      %v584 = vadd.f32 %v512, %v583
      %585 = vdwg.mxu0
      %v586 = vmax.f32 %v582, 0.0
      %v587 = vmax.f32 %v584, 0.0
      %588 = vst [vmem:[%s268] sm:$0xff] %v586
      %589 = vst [vmem:[%s268 + $0x8] sm:$0xff] %v587
      %p590 = scmp.lt.s32.totalorder %s17, 1
      %s591 = scalar_select %p590, %s17, 1
      %s592 = smul.addr %s591, 2
      %s593 = smul.addr %s592, 8
      %s594 = scalar_lea.vmem %s6, %s593
      // Predicated region
      $region45: #{edgenet_forward_batched.1} parent=43 // pred_check
        %p595 = pneg %p171
      $region46: #{edgenet_forward_batched.1} parent=43 // pred_check_branch
        %597 = sbr.rel (%p595) target = $region48
      $region47: #{edgenet_forward_batched.1} parent=43 // pred_region
        _
      $region48: #{edgenet_forward_batched.1} parent=43 // pred_fallthru
        _
    $region44: #{edgenet_forward_batched.1} parent=5 // pred_fallthru
      _
    %p598 = scmp.le.s32.totalorder 2, %s12
    // Predicated region
    $region49: #{edgenet_forward_batched.1} parent=5 // pred_check
      %p599 = pneg %p598
    $region50: #{edgenet_forward_batched.1} parent=5 // pred_check_branch
      %601 = sbr.rel (%p599) target = $region52
    $region51: #{edgenet_forward_batched.1} parent=5 // pred_region
      %s602 = ssub.s32 %s12, 2
      // Predicated region
      $region53: #{edgenet_forward_batched.1} parent=51 // pred_check
        %p603 = pneg %p177
      $region54: #{edgenet_forward_batched.1} parent=51 // pred_check_branch
        %605 = sbr.rel (%p603) target = $region56
      $region55: #{edgenet_forward_batched.1} parent=51 // pred_region
        %p606 = scmp.lt.s32.totalorder %s18, 1
        %s607 = scalar_select %p606, %s18, 1
        %s608 = smul.addr %s607, 2
        %s609 = smul.addr %s608, 8
        %s610 = scalar_lea.vmem %s6, %s609
      $region56: #{edgenet_forward_batched.1} parent=51 // pred_fallthru
        _
    $region52: #{edgenet_forward_batched.1} parent=5 // pred_fallthru
      _
  $region6: #{edgenet_forward_batched.1} parent=0 // loop_footer
    %s16 = sadd.s32 1, %s12
  $region7: #{edgenet_forward_batched.1} parent=0 // loop_footer_branch
    %11 = sbr.rel target = $region3
  $region8: #{edgenet_forward_batched.1} parent=0 // loop_exit
    _

</llo_original>
